<compile_context>
chip_gen: v6e
topology: v6e:2x2x1
jax: 0.10.0
libtpu: 0.0.40
codegen_flags: <defaults>
</compile_context>

<pallas_src>
import jax
import jax.numpy as jnp
import numpy as np
from jax.experimental import pallas as pl
from jax.experimental.pallas import tpu as pltpu


def _round_up(x, m):
    return ((x + m - 1) // m) * m


def _num_tensorcores():
    """v7x has 2 TensorCores per chip; v5e/v6e have 1 (grid is a serial loop per core)."""
    try:
        kind = jax.devices()[0].device_kind.lower()
    except Exception:
        return 1
    return 2 if "v7" in kind else 1


# ----------------------------------------------------------------------------------------------
# Pallas kernel: one decode step for a (bn, ...) batch slab, one vocab tile per inner grid step
# ----------------------------------------------------------------------------------------------
def bah_attn_decoder3_kernel(
    # activations (batch-sharded, vocab-invariant)
    embed_ref,     # [bn, E]        f32  word embedding of the current token
    h0_ref,        # [bn, D]        f32  decoder hidden state (query)
    henc_ref,      # [bn, L, A]     f32  encoder memory (attn_emb)
    encp_ref,      # [bn, L, S]     f32  precomputed enc-side projection (W_enc h_enc + b_attn)
    mask_ref,      # [bn, L]        f32  1.0 = valid source position, 0.0 = padding
    # weights (grid-invariant, single-buffered; MXU operands in bf16)
    v_ref,         # [1, S]         f32  attention score vector
    whhad_ref,     # [D, 3Dp + S]   bf16 fused [ W_hh (r,z,n) | zero pad | W_attn_dec ]
    wie_ref,       # [E, 3D]        bf16 GRU input weights, embed half
    wic_ref,       # [A, 3D]        bf16 GRU input weights, ctx half
    bih_ref,       # [1, 3D]        f32
    bhh_ref,       # [1, 3D]        f32
    # classifier (streamed over the vocab grid axis)
    wcls_ref,      # [D, vt]        bf16
    bcls_ref,      # [1, vt]        f32
    # outputs
    h_ref,         # [bn, D]        f32  new hidden state (== single-step GRU output)
    attnw_ref,     # [bn, L]        f32
    logit_ref,     # [bn, vt]       f32
    # scratch
    hq_ref,        # [bn, D]        bf16 h_new held for the later vocab tiles
):
    vj = pl.program_id(1)

    # ---- attention + GRU: only on the first vocab tile of this batch slab ----
    @pl.when(vj == 0)
    def _():
        embed = embed_ref[...]
        h0 = h0_ref[...]
        h_enc = henc_ref[...]
        enc_proj = encp_ref[...]
        mask = mask_ref[...]

        D = h0.shape[-1]
        S = v_ref.shape[-1]
        threeD = bih_ref.shape[-1]
        threeDp = whhad_ref.shape[-1] - S

        # one fused hidden-side matmul: columns = [ GRU gates (3D) | pad | dec-attn proj (S) ]
        hfused = jnp.dot(h0.astype(jnp.bfloat16), whhad_ref[...],
                         preferred_element_type=jnp.float32)                       # [bn, 3Dp+S]
        gh = hfused[:, :threeD] + bhh_ref[...]                                     # [bn, 3D]
        dec_proj = hfused[:, threeDp:threeDp + S]                                  # [bn, S]

        # Bahdanau attention score: v . tanh(W_dec h_dec + W_enc h_enc + b)
        attn_hidden = jnp.tanh(enc_proj + dec_proj[:, None, :])                    # [bn, L, S]
        score = jnp.sum(attn_hidden * v_ref[...][None, :, :], axis=-1)             # [bn, L]
        score = jnp.where(mask > 0.5, score, -1e10)                                # masked_fill

        # softmax over source positions
        score = score - jnp.max(score, axis=-1, keepdims=True)
        expw = jnp.exp(score)
        denom = jnp.sum(expw, axis=-1, keepdims=True)
        attnw_ref[...] = expw / denom                           # exact for the returned weights
        weights = expw * pl.reciprocal(denom, approx=True)      # approx (EUP) on the ctx path

        # context vector on VPU/XLU (no M=1 MXU bmm)
        ctx = jnp.sum(weights[:, :, None] * h_enc, axis=1)                         # [bn, A]

        # single GRU step on x = [embed ; ctx] without the lane concat
        gi = (jnp.dot(embed.astype(jnp.bfloat16), wie_ref[...],
                      preferred_element_type=jnp.float32)
              + jnp.dot(ctx.astype(jnp.bfloat16), wic_ref[...],
                        preferred_element_type=jnp.float32)
              + bih_ref[...])                                                       # [bn, 3D]
        r = jax.nn.sigmoid(gi[:, 0 * D:1 * D] + gh[:, 0 * D:1 * D])
        z = jax.nn.sigmoid(gi[:, 1 * D:2 * D] + gh[:, 1 * D:2 * D])
        n = jnp.tanh(gi[:, 2 * D:3 * D] + r * gh[:, 2 * D:3 * D])
        h_new = (1.0 - z) * n + z * h0                                              # [bn, D]

        h_ref[...] = h_new
        hq_ref[...] = h_new.astype(jnp.bfloat16)

    # ---- classifier tile (runs every vocab grid step, lane-dense) ----
    logit_ref[...] = (jnp.dot(hq_ref[...], wcls_ref[...],
                              preferred_element_type=jnp.float32) + bcls_ref[...])


# ----------------------------------------------------------------------------------------------
# One-time (model load) weight preparation: transposes, gate fusion, bf16 cast, vocab padding
# ----------------------------------------------------------------------------------------------
def prepare_params(params, vocab_tile=1024):
    V, E = params['word_embedding'].shape
    threeD, D = params['gru_w_hh'].shape
    assert threeD == 3 * D
    S = params['h2attn_w'].shape[0]
    A = params['h2attn_w'].shape[1] - D

    f32 = lambda x: jnp.asarray(x, jnp.float32)
    bf16 = lambda x: x.astype(jnp.bfloat16)

    # h2attn applies to cat(h_dec, h_enc): first D input columns -> decoder, rest -> encoder
    h2attn_wT = f32(params['h2attn_w']).T                 # [D+A, S]
    wad = h2attn_wT[:D]                                   # [D, S] decoder side
    wae = h2attn_wT[D:]                                   # [A, S] encoder side (precompute)

    # fuse the dec-side attention projection into the hidden-side GRU matmul:
    # columns = [ W_hh (3D) | zero pad up to a 128 multiple | W_attn_dec (S) ]
    threeDp = _round_up(threeD, 128)
    whh_T = f32(params['gru_w_hh']).T                     # [D, 3D]
    whh_wad = jnp.zeros((D, threeDp + S), jnp.float32)
    whh_wad = whh_wad.at[:, :threeD].set(whh_T).at[:, threeDp:].set(wad)

    # GRU input weights split into embed / ctx halves (no lane concat in the kernel)
    w_ih_T = f32(params['gru_w_ih']).T                    # [E+A, 3D]
    w_ih_emb = w_ih_T[:E]                                 # [E, 3D]
    w_ih_ctx = w_ih_T[E:]                                 # [A, 3D]

    # classifier: lane-padded and tiled over the vocab axis
    vt = min(vocab_tile, _round_up(V, 128))
    Vp = _round_up(V, vt)
    wcls = jnp.zeros((D, Vp), jnp.float32).at[:, :V].set(f32(params['cls_w']).T)
    bcls = jnp.zeros((1, Vp), jnp.float32).at[:, :V].set(f32(params['cls_b'])[None, :])

    return {
        'word_embedding': f32(params['word_embedding']),
        'wae': wae,
        'b_attn': f32(params['h2attn_b']),
        'v': f32(params['attn_v'])[None, :],              # [1, S]
        'whh_wad': bf16(whh_wad),                         # [D, 3Dp+S]  bf16 MXU operand
        'w_ih_emb': bf16(w_ih_emb),                       # [E, 3D]
        'w_ih_ctx': bf16(w_ih_ctx),                       # [A, 3D]
        'b_ih': f32(params['gru_b_ih'])[None, :],         # [1, 3D]
        'b_hh': f32(params['gru_b_hh'])[None, :],         # [1, 3D]
        'wcls': bf16(wcls),                               # [D, Vp]
        'bcls': bcls,                                     # [1, Vp]
        'dims': dict(V=V, Vp=Vp, vt=vt, E=E, D=D, A=A, S=S, threeD=threeD, threeDp=threeDp),
    }


# ----------------------------------------------------------------------------------------------
# Once-per-utterance precompute (state independent): encoder projection + length mask
# ----------------------------------------------------------------------------------------------
def precompute_encoder(prepared, attn_emb, attn_emb_len):
    N, L, A = attn_emb.shape
    attn_emb = jnp.asarray(attn_emb, jnp.float32)
    enc_proj = jnp.einsum('nla,as->nls', attn_emb, prepared['wae']) + prepared['b_attn']
    mask = (jnp.arange(L)[None, :] < attn_emb_len[:, None]).astype(jnp.float32)
    return {'attn_emb': attn_emb, 'enc_proj': enc_proj, 'mask': mask}


# ----------------------------------------------------------------------------------------------
# Per-token decode step (Pallas)
# ----------------------------------------------------------------------------------------------
def bah_attn_decoder3_step(prepared, enc_cache, word, state=None):
    attn_emb = enc_cache['attn_emb']
    enc_proj = enc_cache['enc_proj']
    mask = enc_cache['mask']
    N, L, A = attn_emb.shape
    dims = prepared['dims']
    D, E, V, Vp, vt, S = dims['D'], dims['E'], dims['V'], dims['Vp'], dims['vt'], dims['S']

    if state is None:
        state = jnp.zeros((1, N, D), jnp.float32)
    h0 = state[0]                        # query = state.transpose(0,1).flatten(1), 1-layer unidir

    if word.shape[-1] == 1:
        embed = prepared['word_embedding'][word[:, 0]]    # [N, E]; eval-mode dropout == identity
    else:
        embed = jnp.asarray(word, jnp.float32)            # pre-computed-embedding branch

    # batch grid: never more grid steps than TensorCores (grid is a serial loop per core);
    # only split when each per-core slab keeps the sublane (multiple-of-8) constraint.
    n_cores = _num_tensorcores()
    if n_cores >= 2 and N % 16 == 0:
        bn = N // 2
    else:
        bn = N
    grid_b = N // bn
    assert grid_b * bn == N, "batch tile must divide the batch"
    n_vtiles = Vp // vt
    grid = (grid_b, n_vtiles)

    def aspec(*tail):                     # batch-sharded, vocab-invariant activation
        nz = len(tail)
        return pl.BlockSpec((bn,) + tuple(tail), lambda i, j, _nz=nz: (i,) + (0,) * _nz)

    def wspec(arr):                       # grid-invariant weight: single-buffered, never re-DMA'd
        return pl.BlockSpec(tuple(arr.shape), lambda i, j: (0, 0),
                            pipeline_mode=pl.Buffered(1))

    in_specs = [
        aspec(E), aspec(D), aspec(L, A), aspec(L, S), aspec(L),
        wspec(prepared['v']),
        wspec(prepared['whh_wad']),
        wspec(prepared['w_ih_emb']), wspec(prepared['w_ih_ctx']),
        wspec(prepared['b_ih']), wspec(prepared['b_hh']),
        pl.BlockSpec((D, vt), lambda i, j: (0, j)),       # streamed classifier tile
        pl.BlockSpec((1, vt), lambda i, j: (0, j)),
    ]
    out_specs = (
        pl.BlockSpec((bn, D), lambda i, j: (i, 0)),       # resident across the vocab axis
        pl.BlockSpec((bn, L), lambda i, j: (i, 0)),
        pl.BlockSpec((bn, vt), lambda i, j: (i, j)),
    )
    out_shapes = (
        jax.ShapeDtypeStruct((N, D), jnp.float32),        # new hidden state
        jax.ShapeDtypeStruct((N, L), jnp.float32),        # attention weights
        jax.ShapeDtypeStruct((N, Vp), jnp.float32),       # lane-padded logits
    )

    # explicit scoped-VMEM limit sized from the resident buffers (with headroom)
    act_bytes = bn * (E + D + L * A + L * S + L) * 4
    w_bytes = (prepared['v'].size * 4 + prepared['whh_wad'].size * 2
               + prepared['w_ih_emb'].size * 2 + prepared['w_ih_ctx'].size * 2
               + prepared['b_ih'].size * 4 + prepared['b_hh'].size * 4)
    cls_bytes = D * vt * 2 + vt * 4
    out_bytes = bn * (D + L + vt) * 4
    resident = 2 * act_bytes + w_bytes + 2 * cls_bytes + 2 * out_bytes + bn * D * 2
    vmem_limit = int(min(48 * 2 ** 20, max(32 * 2 ** 20, 2 * resident)))

    h_new, attn_w, logits_p = pl.pallas_call(
        bah_attn_decoder3_kernel,
        grid=grid,
        in_specs=in_specs,
        out_specs=out_specs,
        out_shape=out_shapes,
        scratch_shapes=[pltpu.VMEM((bn, D), jnp.bfloat16)],
        compiler_params=pltpu.CompilerParams(
            dimension_semantics=("parallel", "arbitrary"),
            vmem_limit_bytes=vmem_limit),
    )(embed, h0, attn_emb, enc_proj, mask,
      prepared['v'], prepared['whh_wad'],
      prepared['w_ih_emb'], prepared['w_ih_ctx'],
      prepared['b_ih'], prepared['b_hh'],
      prepared['wcls'], prepared['bcls'])

    logits = logits_p[:, :V]
    return {
        'state': h_new[None, :, :],       # [1, N, D]
        'embed': h_new[:, None, :],       # [N, 1, D]  (single-step GRU output == new hidden)
        'logit': logits[:, None, :],      # [N, 1, V]
        'attn_weight': attn_w,            # [N, L]
    }


def bah_attn_decoder3_forward(input_dict, params):
    """Convenience wrapper matching the PyTorch forward signature.
    In a real autoregressive loop, call prepare_params once at model load and
    precompute_encoder once per utterance."""
    prepared = prepare_params(params)
    enc_cache = precompute_encoder(prepared, input_dict['attn_emb'], input_dict['attn_emb_len'])
    return bah_attn_decoder3_step(prepared, enc_cache, input_dict['word'], input_dict.get('state'))


# ----------------------------------------------------------------------------------------------
# Pure-JAX reference mirroring the PyTorch forward (eval mode, f32 everywhere)
# ----------------------------------------------------------------------------------------------
def reference_forward(input_dict, params):
    word = input_dict['word']
    attn_emb = input_dict['attn_emb']
    lens = input_dict['attn_emb_len']
    N, L, A = attn_emb.shape
    D = params['gru_w_hh'].shape[1]
    state = input_dict.get('state')
    if state is None:
        state = jnp.zeros((1, N, D), jnp.float32)
    embed = params['word_embedding'][word[:, 0]]                      # [N, E] (dropout = identity)
    query = jnp.transpose(state, (1, 0, 2)).reshape(N, -1)            # [N, D]
    h_dec = jnp.repeat(query[:, None, :], L, axis=1)
    attn_input = jnp.concatenate([h_dec, attn_emb], axis=-1)
    attn_out = jnp.tanh(attn_input @ params['h2attn_w'].T + params['h2attn_b'])
    score = jnp.einsum('s,nls->nl', params['attn_v'], attn_out)
    mask = jnp.arange(L)[None, :] < lens[:, None]
    score = jnp.where(mask, score, -1e10)
    weights = jax.nn.softmax(score, axis=-1)
    ctx = jnp.einsum('nl,nla->na', weights, attn_emb)                 # ctx_proj = identity
    x = jnp.concatenate([embed, ctx], axis=-1)
    h0 = state[0]
    gi = x @ params['gru_w_ih'].T + params['gru_b_ih']
    gh = h0 @ params['gru_w_hh'].T + params['gru_b_hh']
    ir, iz, inn = jnp.split(gi, 3, axis=-1)
    hr, hz, hn = jnp.split(gh, 3, axis=-1)
    r = jax.nn.sigmoid(ir + hr)
    z = jax.nn.sigmoid(iz + hz)
    n = jnp.tanh(inn + r * hn)
    h_new = (1.0 - z) * n + z * h0
    logit = h_new @ params['cls_w'].T + params['cls_b']
    return {'state': h_new[None], 'embed': h_new[:, None], 'logit': logit[:, None],
            'attn_weight': weights}


def init_params(key, V, E, D, A, S):
    ks = jax.random.split(key, 10)
    f = lambda k, shape, s=0.1: (s * jax.random.normal(k, shape)).astype(jnp.float32)
    return {
        'word_embedding': f(ks[0], (V, E)),
        'h2attn_w': f(ks[1], (S, D + A)),     # Linear(attn_emb_dim + d_model, attn_size)
        'h2attn_b': f(ks[2], (S,)),
        'attn_v': f(ks[3], (S,)),
        'gru_w_ih': f(ks[4], (3 * D, E + A)), # GRU(input_size=emb_dim + attn_emb_dim, hidden=D)
        'gru_w_hh': f(ks[5], (3 * D, D)),
        'gru_b_ih': f(ks[6], (3 * D,)),
        'gru_b_hh': f(ks[7], (3 * D,)),
        'cls_w': f(ks[8], (V, D)),            # Linear(d_model, vocab_size)
        'cls_b': f(ks[9], (V,)),
    }


if __name__ == "__main__":
    N, L = 2, 8
    E = D = A = S = 32          # emb_dim = d_model = attn_emb_dim = attn_size
    V = 100                     # vocab_size (not a multiple of 128 -> exercises lane padding)
    FC = 32                     # fc_emb_dim (only used for .device in the PyTorch forward)

    key = jax.random.PRNGKey(0)
    kp, kw, ka, kf = jax.random.split(key, 4)

    params = init_params(kp, V, E, D, A, S)

    input_dict = {
        'word': jax.random.randint(kw, (N, 1), 0, V, dtype=jnp.int32),
        'fc_emb': jax.random.normal(kf, (N, FC), jnp.float32),          # unused in the compute
        'attn_emb': jax.random.normal(ka, (N, L, A), jnp.float32),
        'attn_emb_len': jnp.array([L, 5], jnp.int32),
        'state': None,
    }

    result = bah_attn_decoder3_forward(input_dict, params)
    result = jax.block_until_ready(result)

    ref = reference_forward(input_dict, params)
    # tolerance accounts for bf16 MXU weights and the approximate (EUP) reciprocal on the ctx path
    np.testing.assert_allclose(np.asarray(result['attn_weight']), np.asarray(ref['attn_weight']),
                               rtol=2e-2, atol=2e-2)
    np.testing.assert_allclose(np.asarray(result['embed']), np.asarray(ref['embed']),
                               rtol=2e-2, atol=2e-2)
    np.testing.assert_allclose(np.asarray(result['state']), np.asarray(ref['state']),
                               rtol=2e-2, atol=2e-2)
    np.testing.assert_allclose(np.asarray(result['logit']), np.asarray(ref['logit']),
                               rtol=2e-2, atol=2e-2)

    print("KERNEL_OK")
</pallas_src>

<mosaic_0001>
module attributes {stable_mosaic.version = 11 : i64} {
  func.func @bah_attn_decoder3_kernel(%arg0: i32, %arg1: i32, %arg2: memref<2x32xf32, #tpu.memory_space<vmem>>, %arg3: memref<2x32xf32, #tpu.memory_space<vmem>>, %arg4: memref<2x8x32xf32, #tpu.memory_space<vmem>>, %arg5: memref<2x8x32xf32, #tpu.memory_space<vmem>>, %arg6: memref<2x8xf32, #tpu.memory_space<vmem>>, %arg7: memref<1x32xf32, #tpu.memory_space<vmem>>, %arg8: memref<32x160xbf16, #tpu.memory_space<vmem>>, %arg9: memref<32x96xbf16, #tpu.memory_space<vmem>>, %arg10: memref<32x96xbf16, #tpu.memory_space<vmem>>, %arg11: memref<1x96xf32, #tpu.memory_space<vmem>>, %arg12: memref<1x96xf32, #tpu.memory_space<vmem>>, %arg13: memref<32x128xbf16, #tpu.memory_space<vmem>>, %arg14: memref<1x128xf32, #tpu.memory_space<vmem>>, %arg15: memref<2x32xf32, #tpu.memory_space<vmem>>, %arg16: memref<2x8xf32, #tpu.memory_space<vmem>>, %arg17: memref<2x128xf32, #tpu.memory_space<vmem>>, %arg18: memref<2x32xbf16, #tpu.memory_space<vmem>>) attributes {dimension_semantics = [#tpu.dimension_semantics<parallel>, #tpu.dimension_semantics<arbitrary>], iteration_bounds = array<i64: 1, 1>, scalar_prefetch = 0 : i64, scratch_operands = 1 : i64, tpu.core_type = #tpu.core_type<tc>, window_params = [{transform_indices = @transform_0, window_bounds = array<i64: 2, 32>}, {transform_indices = @transform_1, window_bounds = array<i64: 2, 32>}, {transform_indices = @transform_2, window_bounds = array<i64: 2, 8, 32>}, {transform_indices = @transform_3, window_bounds = array<i64: 2, 8, 32>}, {transform_indices = @transform_4, window_bounds = array<i64: 2, 8>}, {pipeline_mode = #tpu.pipeline_mode<synchronous>, transform_indices = @transform_5, window_bounds = array<i64: 1, 32>}, {pipeline_mode = #tpu.pipeline_mode<synchronous>, transform_indices = @transform_6, window_bounds = array<i64: 32, 160>}, {pipeline_mode = #tpu.pipeline_mode<synchronous>, transform_indices = @transform_7, window_bounds = array<i64: 32, 96>}, {pipeline_mode = #tpu.pipeline_mode<synchronous>, transform_indices = @transform_8, window_bounds = array<i64: 32, 96>}, {pipeline_mode = #tpu.pipeline_mode<synchronous>, transform_indices = @transform_9, window_bounds = array<i64: 1, 96>}, {pipeline_mode = #tpu.pipeline_mode<synchronous>, transform_indices = @transform_10, window_bounds = array<i64: 1, 96>}, {transform_indices = @transform_11, window_bounds = array<i64: 32, 128>}, {transform_indices = @transform_12, window_bounds = array<i64: 1, 128>}, {transform_indices = @transform_13, window_bounds = array<i64: 2, 32>}, {transform_indices = @transform_14, window_bounds = array<i64: 2, 8>}, {transform_indices = @transform_15, window_bounds = array<i64: 2, 128>}]} {
    %c0_i32 = arith.constant 0 : i32
    %0 = arith.cmpi eq, %arg1, %c0_i32 : i32
    %1 = arith.extui %0 : i1 to i32
    %c0_i32_0 = arith.constant 0 : i32
    %2 = arith.cmpi ne, %1, %c0_i32_0 : i32
    scf.if %2 {
      %c0_8 = arith.constant 0 : index
      %c0_9 = arith.constant 0 : index
      %10 = vector.load %arg2[%c0_8, %c0_9] : memref<2x32xf32, #tpu.memory_space<vmem>>, vector<2x32xf32>
      %c0_10 = arith.constant 0 : index
      %c0_11 = arith.constant 0 : index
      %11 = vector.load %arg3[%c0_10, %c0_11] : memref<2x32xf32, #tpu.memory_space<vmem>>, vector<2x32xf32>
      %c0_12 = arith.constant 0 : index
      %c0_13 = arith.constant 0 : index
      %c0_14 = arith.constant 0 : index
      %12 = vector.load %arg4[%c0_12, %c0_13, %c0_14] : memref<2x8x32xf32, #tpu.memory_space<vmem>>, vector<2x8x32xf32>
      %c0_15 = arith.constant 0 : index
      %c0_16 = arith.constant 0 : index
      %c0_17 = arith.constant 0 : index
      %13 = vector.load %arg5[%c0_15, %c0_16, %c0_17] : memref<2x8x32xf32, #tpu.memory_space<vmem>>, vector<2x8x32xf32>
      %c0_18 = arith.constant 0 : index
      %c0_19 = arith.constant 0 : index
      %14 = vector.load %arg6[%c0_18, %c0_19] : memref<2x8xf32, #tpu.memory_space<vmem>>, vector<2x8xf32>
      %15 = arith.truncf %11 : vector<2x32xf32> to vector<2x32xbf16>
      %c0_20 = arith.constant 0 : index
      %c0_21 = arith.constant 0 : index
      %16 = vector.load %arg8[%c0_20, %c0_21] : memref<32x160xbf16, #tpu.memory_space<vmem>>, vector<32x160xbf16>
      %cst_22 = arith.constant dense<0.000000e+00> : vector<2x160xf32>
      %17 = tpu.matmul %15, %16, %cst_22 {dimension_numbers = #tpu.dot_dimension_numbers<[1], [0], [0], [1], [0, 0, 1, 1], [], []>} : vector<2x32xbf16>, vector<32x160xbf16>, vector<2x160xf32> -> vector<2x160xf32>
      %18 = vector.extract_strided_slice %17 {offsets = [0, 0], sizes = [2, 96], strides = [1, 1]} : vector<2x160xf32> to vector<2x96xf32>
      %c0_23 = arith.constant 0 : index
      %c0_24 = arith.constant 0 : index
      %19 = vector.load %arg12[%c0_23, %c0_24] : memref<1x96xf32, #tpu.memory_space<vmem>>, vector<1x96xf32>
      %20 = vector.broadcast %19 : vector<1x96xf32> to vector<2x96xf32>
      %21 = arith.addf %18, %20 : vector<2x96xf32>
      %22 = vector.extract_strided_slice %17 {offsets = [0, 128], sizes = [2, 32], strides = [1, 1]} : vector<2x160xf32> to vector<2x32xf32>
      %23 = vector.shape_cast %22 : vector<2x32xf32> to vector<2x1x32xf32>
      %24 = vector.broadcast %23 : vector<2x1x32xf32> to vector<2x8x32xf32>
      %25 = arith.addf %13, %24 : vector<2x8x32xf32>
      %26 = math.tanh %25 : vector<2x8x32xf32>
      %c0_25 = arith.constant 0 : index
      %c0_26 = arith.constant 0 : index
      %27 = vector.load %arg7[%c0_25, %c0_26] : memref<1x32xf32, #tpu.memory_space<vmem>>, vector<1x32xf32>
      %28 = vector.shape_cast %27 : vector<1x32xf32> to vector<1x1x32xf32>
      %29 = vector.broadcast %28 : vector<1x1x32xf32> to vector<2x8x32xf32>
      %30 = arith.mulf %26, %29 : vector<2x8x32xf32>
      %cst_27 = arith.constant dense<0.000000e+00> : vector<2x8xf32>
      %31 = vector.multi_reduction <add>, %30, %cst_27 [2] : vector<2x8x32xf32> to vector<2x8xf32>
      %cst_28 = arith.constant 5.000000e-01 : f32
      %32 = vector.broadcast %cst_28 : f32 to vector<2x8xf32>
      %33 = arith.cmpf ogt, %14, %32 : vector<2x8xf32>
      %cst_29 = arith.constant -1.000000e+10 : f32
      %34 = vector.broadcast %cst_29 : f32 to vector<2x8xf32>
      %35 = arith.select %33, %31, %34 : vector<2x8xi1>, vector<2x8xf32>
      %cst_30 = arith.constant dense<0xFF800000> : vector<2xf32>
      %36 = vector.multi_reduction <maximumf>, %35, %cst_30 [1] : vector<2x8xf32> to vector<2xf32>
      %37 = vector.shape_cast %36 : vector<2xf32> to vector<2x1xf32>
      %38 = vector.broadcast %37 : vector<2x1xf32> to vector<2x8xf32>
      %39 = arith.subf %35, %38 : vector<2x8xf32>
      %40 = math.exp %39 : vector<2x8xf32>
      %cst_31 = arith.constant dense<0.000000e+00> : vector<2xf32>
      %41 = vector.multi_reduction <add>, %40, %cst_31 [1] : vector<2x8xf32> to vector<2xf32>
      %42 = vector.shape_cast %41 : vector<2xf32> to vector<2x1xf32>
      %43 = vector.broadcast %42 : vector<2x1xf32> to vector<2x8xf32>
      %44 = arith.divf %40, %43 : vector<2x8xf32>
      %c0_32 = arith.constant 0 : index
      %c0_33 = arith.constant 0 : index
      %45 = vector.load %arg16[%c0_32, %c0_33] : memref<2x8xf32, #tpu.memory_space<vmem>>, vector<2x8xf32>
      tpu.vector_store %arg16[%c0_32, %c0_33], %44 {strides = array<i32>} : memref<2x8xf32, #tpu.memory_space<vmem>>, vector<2x8xf32>,
      %46 = tpu.reciprocal %42 {approx = true} : vector<2x1xf32> -> vector<2x1xf32>
      %47 = vector.broadcast %46 : vector<2x1xf32> to vector<2x8xf32>
      %48 = arith.mulf %40, %47 : vector<2x8xf32>
      %49 = vector.shape_cast %48 : vector<2x8xf32> to vector<2x8x1xf32>
      %50 = vector.broadcast %49 : vector<2x8x1xf32> to vector<2x8x32xf32>
      %51 = arith.mulf %50, %12 : vector<2x8x32xf32>
      %cst_34 = arith.constant dense<0.000000e+00> : vector<2x32xf32>
      %52 = vector.multi_reduction <add>, %51, %cst_34 [1] : vector<2x8x32xf32> to vector<2x32xf32>
      %53 = arith.truncf %10 : vector<2x32xf32> to vector<2x32xbf16>
      %c0_35 = arith.constant 0 : index
      %c0_36 = arith.constant 0 : index
      %54 = vector.load %arg9[%c0_35, %c0_36] : memref<32x96xbf16, #tpu.memory_space<vmem>>, vector<32x96xbf16>
      %cst_37 = arith.constant dense<0.000000e+00> : vector<2x96xf32>
      %55 = tpu.matmul %53, %54, %cst_37 {dimension_numbers = #tpu.dot_dimension_numbers<[1], [0], [0], [1], [0, 0, 1, 1], [], []>} : vector<2x32xbf16>, vector<32x96xbf16>, vector<2x96xf32> -> vector<2x96xf32>
      %56 = arith.truncf %52 : vector<2x32xf32> to vector<2x32xbf16>
      %c0_38 = arith.constant 0 : index
      %c0_39 = arith.constant 0 : index
      %57 = vector.load %arg10[%c0_38, %c0_39] : memref<32x96xbf16, #tpu.memory_space<vmem>>, vector<32x96xbf16>
      %cst_40 = arith.constant dense<0.000000e+00> : vector<2x96xf32>
      %58 = tpu.matmul %56, %57, %cst_40 {dimension_numbers = #tpu.dot_dimension_numbers<[1], [0], [0], [1], [0, 0, 1, 1], [], []>} : vector<2x32xbf16>, vector<32x96xbf16>, vector<2x96xf32> -> vector<2x96xf32>
      %59 = arith.addf %55, %58 : vector<2x96xf32>
      %c0_41 = arith.constant 0 : index
      %c0_42 = arith.constant 0 : index
      %60 = vector.load %arg11[%c0_41, %c0_42] : memref<1x96xf32, #tpu.memory_space<vmem>>, vector<1x96xf32>
      %61 = vector.broadcast %60 : vector<1x96xf32> to vector<2x96xf32>
      %62 = arith.addf %59, %61 : vector<2x96xf32>
      %63 = vector.extract_strided_slice %62 {offsets = [0, 0], sizes = [2, 32], strides = [1, 1]} : vector<2x96xf32> to vector<2x32xf32>
      %64 = vector.extract_strided_slice %21 {offsets = [0, 0], sizes = [2, 32], strides = [1, 1]} : vector<2x96xf32> to vector<2x32xf32>
      %65 = arith.addf %63, %64 : vector<2x32xf32>
      %66 = arith.negf %65 : vector<2x32xf32>
      %67 = math.exp %66 : vector<2x32xf32>
      %cst_43 = arith.constant 1.000000e+00 : f32
      %68 = vector.broadcast %cst_43 : f32 to vector<2x32xf32>
      %69 = arith.addf %68, %67 : vector<2x32xf32>
      %70 = arith.divf %68, %69 : vector<2x32xf32>
      %71 = vector.extract_strided_slice %62 {offsets = [0, 32], sizes = [2, 32], strides = [1, 1]} : vector<2x96xf32> to vector<2x32xf32>
      %72 = vector.extract_strided_slice %21 {offsets = [0, 32], sizes = [2, 32], strides = [1, 1]} : vector<2x96xf32> to vector<2x32xf32>
      %73 = arith.addf %71, %72 : vector<2x32xf32>
      %74 = arith.negf %73 : vector<2x32xf32>
      %75 = math.exp %74 : vector<2x32xf32>
      %cst_44 = arith.constant 1.000000e+00 : f32
      %76 = vector.broadcast %cst_44 : f32 to vector<2x32xf32>
      %77 = arith.addf %76, %75 : vector<2x32xf32>
      %78 = arith.divf %76, %77 : vector<2x32xf32>
      %79 = vector.extract_strided_slice %62 {offsets = [0, 64], sizes = [2, 32], strides = [1, 1]} : vector<2x96xf32> to vector<2x32xf32>
      %80 = vector.extract_strided_slice %21 {offsets = [0, 64], sizes = [2, 32], strides = [1, 1]} : vector<2x96xf32> to vector<2x32xf32>
      %81 = arith.mulf %70, %80 : vector<2x32xf32>
      %82 = arith.addf %79, %81 : vector<2x32xf32>
      %83 = math.tanh %82 : vector<2x32xf32>
      %cst_45 = arith.constant 1.000000e+00 : f32
      %84 = vector.broadcast %cst_45 : f32 to vector<2x32xf32>
      %85 = arith.subf %84, %78 : vector<2x32xf32>
      %86 = arith.mulf %85, %83 : vector<2x32xf32>
      %87 = arith.mulf %78, %11 : vector<2x32xf32>
      %88 = arith.addf %86, %87 : vector<2x32xf32>
      %c0_46 = arith.constant 0 : index
      %c0_47 = arith.constant 0 : index
      %89 = vector.load %arg15[%c0_46, %c0_47] : memref<2x32xf32, #tpu.memory_space<vmem>>, vector<2x32xf32>
      tpu.vector_store %arg15[%c0_46, %c0_47], %88 {strides = array<i32>} : memref<2x32xf32, #tpu.memory_space<vmem>>, vector<2x32xf32>,
      %90 = arith.truncf %88 : vector<2x32xf32> to vector<2x32xbf16>
      %c0_48 = arith.constant 0 : index
      %c0_49 = arith.constant 0 : index
      %91 = vector.load %arg18[%c0_48, %c0_49] : memref<2x32xbf16, #tpu.memory_space<vmem>>, vector<2x32xbf16>
      tpu.vector_store %arg18[%c0_48, %c0_49], %90 {strides = array<i32>} : memref<2x32xbf16, #tpu.memory_space<vmem>>, vector<2x32xbf16>,
    } else {
    }
    %c0 = arith.constant 0 : index
    %c0_1 = arith.constant 0 : index
    %3 = vector.load %arg18[%c0, %c0_1] : memref<2x32xbf16, #tpu.memory_space<vmem>>, vector<2x32xbf16>
    %c0_2 = arith.constant 0 : index
    %c0_3 = arith.constant 0 : index
    %4 = vector.load %arg13[%c0_2, %c0_3] : memref<32x128xbf16, #tpu.memory_space<vmem>>, vector<32x128xbf16>
    %cst = arith.constant dense<0.000000e+00> : vector<2x128xf32>
    %5 = tpu.matmul %3, %4, %cst {dimension_numbers = #tpu.dot_dimension_numbers<[1], [0], [0], [1], [0, 0, 1, 1], [], []>} : vector<2x32xbf16>, vector<32x128xbf16>, vector<2x128xf32> -> vector<2x128xf32>
    %c0_4 = arith.constant 0 : index
    %c0_5 = arith.constant 0 : index
    %6 = vector.load %arg14[%c0_4, %c0_5] : memref<1x128xf32, #tpu.memory_space<vmem>>, vector<1x128xf32>
    %7 = vector.broadcast %6 : vector<1x128xf32> to vector<2x128xf32>
    %8 = arith.addf %5, %7 : vector<2x128xf32>
    %c0_6 = arith.constant 0 : index
    %c0_7 = arith.constant 0 : index
    %9 = vector.load %arg17[%c0_6, %c0_7] : memref<2x128xf32, #tpu.memory_space<vmem>>, vector<2x128xf32>
    tpu.vector_store %arg17[%c0_6, %c0_7], %8 {strides = array<i32>} : memref<2x128xf32, #tpu.memory_space<vmem>>, vector<2x128xf32>,
    return
  }
  func.func @transform_0(%arg0: i32, %arg1: i32) -> (i32, i32) {
    %c0_i32 = arith.constant 0 : i32
    %c0_i32_0 = arith.constant 0 : i32
    return %arg0, %c0_i32 : i32, i32
  }
  func.func @transform_1(%arg0: i32, %arg1: i32) -> (i32, i32) {
    %c0_i32 = arith.constant 0 : i32
    %c0_i32_0 = arith.constant 0 : i32
    return %arg0, %c0_i32 : i32, i32
  }
  func.func @transform_2(%arg0: i32, %arg1: i32) -> (i32, i32, i32) {
    %c0_i32 = arith.constant 0 : i32
    %c0_i32_0 = arith.constant 0 : i32
    %c0_i32_1 = arith.constant 0 : i32
    return %arg0, %c0_i32, %c0_i32_0 : i32, i32, i32
  }
  func.func @transform_3(%arg0: i32, %arg1: i32) -> (i32, i32, i32) {
    %c0_i32 = arith.constant 0 : i32
    %c0_i32_0 = arith.constant 0 : i32
    %c0_i32_1 = arith.constant 0 : i32
    return %arg0, %c0_i32, %c0_i32_0 : i32, i32, i32
  }
  func.func @transform_4(%arg0: i32, %arg1: i32) -> (i32, i32) {
    %c0_i32 = arith.constant 0 : i32
    %c0_i32_0 = arith.constant 0 : i32
    return %arg0, %c0_i32 : i32, i32
  }
  func.func @transform_5(%arg0: i32, %arg1: i32) -> (i32, i32) {
    %c0_i32 = arith.constant 0 : i32
    %c0_i32_0 = arith.constant 0 : i32
    %c0_i32_1 = arith.constant 0 : i32
    return %c0_i32, %c0_i32_0 : i32, i32
  }
  func.func @transform_6(%arg0: i32, %arg1: i32) -> (i32, i32) {
    %c0_i32 = arith.constant 0 : i32
    %c0_i32_0 = arith.constant 0 : i32
    %c0_i32_1 = arith.constant 0 : i32
    return %c0_i32, %c0_i32_0 : i32, i32
  }
  func.func @transform_7(%arg0: i32, %arg1: i32) -> (i32, i32) {
    %c0_i32 = arith.constant 0 : i32
    %c0_i32_0 = arith.constant 0 : i32
    %c0_i32_1 = arith.constant 0 : i32
    return %c0_i32, %c0_i32_0 : i32, i32
  }
  func.func @transform_8(%arg0: i32, %arg1: i32) -> (i32, i32) {
    %c0_i32 = arith.constant 0 : i32
    %c0_i32_0 = arith.constant 0 : i32
    %c0_i32_1 = arith.constant 0 : i32
    return %c0_i32, %c0_i32_0 : i32, i32
  }
  func.func @transform_9(%arg0: i32, %arg1: i32) -> (i32, i32) {
    %c0_i32 = arith.constant 0 : i32
    %c0_i32_0 = arith.constant 0 : i32
    %c0_i32_1 = arith.constant 0 : i32
    return %c0_i32, %c0_i32_0 : i32, i32
  }
  func.func @transform_10(%arg0: i32, %arg1: i32) -> (i32, i32) {
    %c0_i32 = arith.constant 0 : i32
    %c0_i32_0 = arith.constant 0 : i32
    %c0_i32_1 = arith.constant 0 : i32
    return %c0_i32, %c0_i32_0 : i32, i32
  }
  func.func @transform_11(%arg0: i32, %arg1: i32) -> (i32, i32) {
    %c0_i32 = arith.constant 0 : i32
    %c0_i32_0 = arith.constant 0 : i32
    return %c0_i32, %arg1 : i32, i32
  }
  func.func @transform_12(%arg0: i32, %arg1: i32) -> (i32, i32) {
    %c0_i32 = arith.constant 0 : i32
    %c0_i32_0 = arith.constant 0 : i32
    return %c0_i32, %arg1 : i32, i32
  }
  func.func @transform_13(%arg0: i32, %arg1: i32) -> (i32, i32) {
    %c0_i32 = arith.constant 0 : i32
    %c0_i32_0 = arith.constant 0 : i32
    return %arg0, %c0_i32 : i32, i32
  }
  func.func @transform_14(%arg0: i32, %arg1: i32) -> (i32, i32) {
    %c0_i32 = arith.constant 0 : i32
    %c0_i32_0 = arith.constant 0 : i32
    return %arg0, %c0_i32 : i32, i32
  }
  func.func @transform_15(%arg0: i32, %arg1: i32) -> (i32, i32) {
    %c0_i32 = arith.constant 0 : i32
    return %arg0, %arg1 : i32, i32
  }
}

</mosaic_0001>

<llo_original>
// kernel: tpu_custom_call.1
$region0: #{tpu_custom_call.1}
  #allocation0 [shape = 'u32[]', space=smem, size = 0x4, offset = 0x4, fixed_abs, tag = 'smem constant byte address 0x4 - core index']
  #allocation1 [shape = 'u32[144,128]{1,0:T(1,128)}', space=vmem, size = 0x12000, scoped, tag = 'internal scratch']
  #allocation2 [shape = 'bf16[2,32]{1,0:T(2,128)(2,1)}', space=vmem, size = 0x200, scoped, tag = 'scratch operand']
  %s0 = inlined_call_operand.hbm [shape: f32[2,32], index: 0, kind: input, shape index: {}]
  %s1 = inlined_call_operand.hbm [shape: f32[2,32], index: 1, kind: input, shape index: {}]
  %s2 = inlined_call_operand.hbm [shape: f32[2,8,32], index: 2, kind: input, shape index: {}]
  %s3 = inlined_call_operand.hbm [shape: f32[2,8,32], index: 3, kind: input, shape index: {}]
  %s4 = inlined_call_operand.vmem [shape: f32[2,8], index: 4, kind: input, shape index: {}]
  %s5 = inlined_call_operand.vmem [shape: f32[1,32], index: 5, kind: input, shape index: {}]
  %s6 = inlined_call_operand.hbm [shape: bf16[32,160], index: 6, kind: input, shape index: {}]
  %s7 = inlined_call_operand.hbm [shape: bf16[32,96], index: 7, kind: input, shape index: {}]
  %s8 = inlined_call_operand.hbm [shape: bf16[32,96], index: 8, kind: input, shape index: {}]
  %s9 = inlined_call_operand.vmem [shape: f32[1,96], index: 9, kind: input, shape index: {}]
  %s10 = inlined_call_operand.hbm [shape: f32[1,96], index: 10, kind: input, shape index: {}]
  %s11 = inlined_call_operand.vmem [shape: bf16[32,128], index: 11, kind: input, shape index: {}]
  %s12 = inlined_call_operand.vmem [shape: f32[1,128], index: 12, kind: input, shape index: {}]
  %s13 = inlined_call_operand.hbm [shape: f32[2,32], index: 13, kind: output, shape index: {0}]
  %s14 = inlined_call_operand.hbm [shape: f32[2,8], index: 14, kind: output, shape index: {1}]
  %s15 = inlined_call_operand.hbm [shape: f32[2,128], index: 15, kind: output, shape index: {2}]
  %16 = xla_tuple %s13, %s14, %s15
  %s17 = sld [smem:[#allocation0]]
  $region114: #{tpu_custom_call.1} parent=0
    _
  %s19 = ssub.s32 1, %s17
  %s20 = scalar_select 0, %s19, %s17
  $region1: #{tpu_custom_call.1} parent=0
    #allocation3 [shape = 'u8[1024]{0}', space=vmem, size = 0x400, scoped, tag = 'input window, operand 0, single buffered']
    #allocation4 [shape = 's32[1]{0}', space=sflag, size = 0x4, scoped, tag = 'scoped memory for tpu_custom_call.1']
    #allocation5 [shape = 's32[1]{0}', space=sflag, size = 0x4, scoped, tag = 'scoped memory for tpu_custom_call.1']
    #allocation6 [shape = 'u8[1024]{0}', space=vmem, size = 0x400, scoped, tag = 'input window, operand 1, single buffered']
    #allocation7 [shape = 's32[1]{0}', space=sflag, size = 0x4, scoped, tag = 'scoped memory for tpu_custom_call.1']
    #allocation8 [shape = 'u8[8192]{0}', space=vmem, size = 0x2000, scoped, tag = 'input window, operand 2, single buffered']
    #allocation9 [shape = 'u8[8192]{0}', space=vmem, size = 0x2000, scoped, tag = 'input window, operand 3, single buffered']
    #allocation10 [shape = 's32[1]{0}', space=sflag, size = 0x4, scoped, tag = 'scoped memory for tpu_custom_call.1']
    #allocation11 [shape = 'u8[16384]{0}', space=vmem, size = 0x4000, scoped, tag = 'input window, operand 6, single buffered']
    #allocation12 [shape = 'u8[8192]{0}', space=vmem, size = 0x2000, scoped, tag = 'input window, operand 7, single buffered']
    #allocation13 [shape = 's32[1]{0}', space=sflag, size = 0x4, scoped, tag = 'scoped memory for tpu_custom_call.1']
    #allocation14 [shape = 'u8[8192]{0}', space=vmem, size = 0x2000, scoped, tag = 'input window, operand 8, single buffered']
    #allocation15 [shape = 'u8[512]{0}', space=vmem, size = 0x400, scoped, tag = 'input window, operand 10, single buffered']
    #allocation16 [shape = 's32[1]{0}', space=sflag, size = 0x4, scoped, tag = 'scoped memory for tpu_custom_call.1']
    #allocation17 [shape = 'u8[1024]{0}', space=vmem, size = 0x400, scoped, tag = 'output window, operand 0, single buffered']
    #allocation18 [shape = 'u8[1024]{0}', space=vmem, size = 0x400, scoped, tag = 'output window, operand 1, single buffered']
    #allocation19 [shape = 's32[1]{0}', space=sflag, size = 0x4, scoped, tag = 'scoped memory for tpu_custom_call.1']
    #allocation20 [shape = 'u8[1024]{0}', space=vmem, size = 0x400, scoped, tag = 'output window, operand 2, single buffered']
    %21 = vsyncpa [#allocation4], 0
    %22 = vsyncpa [#allocation7], 0
    %23 = vsyncpa [#allocation10], 0
    %24 = vsyncpa [#allocation13], 0
    %25 = vsyncpa [#allocation16], 0
    %26 = vsyncpa [#allocation5], 0
    %27 = vsyncpa [#allocation19], 0
    // Predicated region
    $region2: #{tpu_custom_call.1} parent=1 // pred_check
      _
    $region3: #{tpu_custom_call.1} parent=1 // pred_check_branch
      %29 = sbr.rel (0) target = $region5
    $region4: #{tpu_custom_call.1} parent=1 // pred_region
      %s31 = ssub.s32 32, 32
      %32 = vsyncadd [#allocation4], %s31
      %s34 = sshll.u32 [#allocation3], 4
      %s35 = int_to_ptr.vmem [resolvable:$true] %s34
      %37 = dma.hbm_to_vmem [thread:$0]  %s0, 32, %s35, [#allocation4]
    $region5: #{tpu_custom_call.1} parent=1 // pred_fallthru
      _
    // Predicated region
    $region6: #{tpu_custom_call.1} parent=1 // pred_check
      _
    $region7: #{tpu_custom_call.1} parent=1 // pred_check_branch
      %39 = sbr.rel (0) target = $region9
    $region8: #{tpu_custom_call.1} parent=1 // pred_region
      %s41 = ssub.s32 32, 32
      %42 = vsyncadd [#allocation7], %s41
      %s44 = sshll.u32 [#allocation6], 4
      %s45 = int_to_ptr.vmem [resolvable:$true] %s44
      %47 = dma.hbm_to_vmem [thread:$0]  %s1, 32, %s45, [#allocation7]
    $region9: #{tpu_custom_call.1} parent=1 // pred_fallthru
      _
    // Predicated region
    $region10: #{tpu_custom_call.1} parent=1 // pred_check
      _
    $region11: #{tpu_custom_call.1} parent=1 // pred_check_branch
      %49 = sbr.rel (0) target = $region13
    $region12: #{tpu_custom_call.1} parent=1 // pred_region
      %s51 = ssub.s32 256, 256
      %52 = vsyncadd [#allocation7], %s51
      %s53 = sshll.u32 [#allocation8], 4
      %s54 = int_to_ptr.vmem [resolvable:$true] %s53
      %59 = dma.hbm_to_vmem [thread:$0]  %s2, 256, %s54, [#allocation7], 128, 128, 8
    $region13: #{tpu_custom_call.1} parent=1 // pred_fallthru
      _
    // Predicated region
    $region14: #{tpu_custom_call.1} parent=1 // pred_check
      _
    $region15: #{tpu_custom_call.1} parent=1 // pred_check_branch
      %61 = sbr.rel (0) target = $region17
    $region16: #{tpu_custom_call.1} parent=1 // pred_region
      %s63 = ssub.s32 256, 256
      %64 = vsyncadd [#allocation10], %s63
      %s65 = sshll.u32 [#allocation9], 4
      %s66 = int_to_ptr.vmem [resolvable:$true] %s65
      %71 = dma.hbm_to_vmem [thread:$0]  %s3, 256, %s66, [#allocation10], 128, 128, 8
    $region17: #{tpu_custom_call.1} parent=1 // pred_fallthru
      _
    // Predicated region
    $region18: #{tpu_custom_call.1} parent=1 // pred_check
      _
    $region19: #{tpu_custom_call.1} parent=1 // pred_check_branch
      %73 = sbr.rel (0) target = $region21
    $region20: #{tpu_custom_call.1} parent=1 // pred_region
      _
    $region21: #{tpu_custom_call.1} parent=1 // pred_fallthru
      _
    // Predicated region
    $region22: #{tpu_custom_call.1} parent=1 // pred_check
      _
    $region23: #{tpu_custom_call.1} parent=1 // pred_check_branch
      %75 = sbr.rel (0) target = $region25
    $region24: #{tpu_custom_call.1} parent=1 // pred_region
      _
    $region25: #{tpu_custom_call.1} parent=1 // pred_fallthru
      _
    // Predicated region
    $region26: #{tpu_custom_call.1} parent=1 // pred_check
      _
    $region27: #{tpu_custom_call.1} parent=1 // pred_check_branch
      %77 = sbr.rel (0) target = $region29
    $region28: #{tpu_custom_call.1} parent=1 // pred_region
      %s79 = ssub.s32 512, 512
      %80 = vsyncadd [#allocation10], %s79
      %s81 = sshll.u32 [#allocation11], 4
      %s82 = int_to_ptr.vmem [resolvable:$true] %s81
      %87 = dma.hbm_to_vmem [thread:$0]  %s6, 512, %s82, [#allocation10], 128, 128, 8
    $region29: #{tpu_custom_call.1} parent=1 // pred_fallthru
      _
    // Predicated region
    $region30: #{tpu_custom_call.1} parent=1 // pred_check
      _
    $region31: #{tpu_custom_call.1} parent=1 // pred_check_branch
      %89 = sbr.rel (0) target = $region33
    $region32: #{tpu_custom_call.1} parent=1 // pred_region
      %s91 = ssub.s32 256, 256
      %92 = vsyncadd [#allocation13], %s91
      %s93 = sshll.u32 [#allocation12], 4
      %s94 = int_to_ptr.vmem [resolvable:$true] %s93
      %99 = dma.hbm_to_vmem [thread:$0]  %s7, 256, %s94, [#allocation13], 64, 64, 4
    $region33: #{tpu_custom_call.1} parent=1 // pred_fallthru
      _
    // Predicated region
    $region34: #{tpu_custom_call.1} parent=1 // pred_check
      _
    $region35: #{tpu_custom_call.1} parent=1 // pred_check_branch
      %101 = sbr.rel (0) target = $region37
    $region36: #{tpu_custom_call.1} parent=1 // pred_region
      %s103 = ssub.s32 256, 256
      %104 = vsyncadd [#allocation13], %s103
      %s105 = sshll.u32 [#allocation14], 4
      %s106 = int_to_ptr.vmem [resolvable:$true] %s105
      %111 = dma.hbm_to_vmem [thread:$0]  %s8, 256, %s106, [#allocation13], 64, 64, 4
    $region37: #{tpu_custom_call.1} parent=1 // pred_fallthru
      _
    // Predicated region
    $region38: #{tpu_custom_call.1} parent=1 // pred_check
      _
    $region39: #{tpu_custom_call.1} parent=1 // pred_check_branch
      %113 = sbr.rel (0) target = $region41
    $region40: #{tpu_custom_call.1} parent=1 // pred_region
      _
    $region41: #{tpu_custom_call.1} parent=1 // pred_fallthru
      _
    // Predicated region
    $region42: #{tpu_custom_call.1} parent=1 // pred_check
      _
    $region43: #{tpu_custom_call.1} parent=1 // pred_check_branch
      %115 = sbr.rel (0) target = $region45
    $region44: #{tpu_custom_call.1} parent=1 // pred_region
      %s117 = ssub.s32 16, 16
      %118 = vsyncadd [#allocation16], %s117
      %s120 = sshll.u32 [#allocation15], 4
      %s121 = int_to_ptr.vmem [resolvable:$true] %s120
      %123 = dma.hbm_to_vmem [thread:$0]  %s10, 16, %s121, [#allocation16]
    $region45: #{tpu_custom_call.1} parent=1 // pred_fallthru
      _
    // Predicated region
    $region46: #{tpu_custom_call.1} parent=1 // pred_check
      _
    $region47: #{tpu_custom_call.1} parent=1 // pred_check_branch
      %125 = sbr.rel (0) target = $region49
    $region48: #{tpu_custom_call.1} parent=1 // pred_region
      _
    $region49: #{tpu_custom_call.1} parent=1 // pred_fallthru
      _
    // Predicated region
    $region50: #{tpu_custom_call.1} parent=1 // pred_check
      _
    $region51: #{tpu_custom_call.1} parent=1 // pred_check_branch
      %127 = sbr.rel (0) target = $region53
    $region52: #{tpu_custom_call.1} parent=1 // pred_region
      _
    $region53: #{tpu_custom_call.1} parent=1 // pred_fallthru
      _
    // Predicated region
    $region54: #{tpu_custom_call.1} parent=1 // pred_check
      _
    $region55: #{tpu_custom_call.1} parent=1 // pred_check_branch
      %129 = sbr.rel (0) target = $region57
    $region56: #{tpu_custom_call.1} parent=1 // pred_region
      %130 = dma.done [#allocation4], 32
    $region57: #{tpu_custom_call.1} parent=1 // pred_fallthru
      _
    // Predicated region
    $region58: #{tpu_custom_call.1} parent=1 // pred_check
      _
    $region59: #{tpu_custom_call.1} parent=1 // pred_check_branch
      %132 = sbr.rel (0) target = $region61
    $region60: #{tpu_custom_call.1} parent=1 // pred_region
      %133 = dma.done [#allocation7], 32
    $region61: #{tpu_custom_call.1} parent=1 // pred_fallthru
      _
    // Predicated region
    $region62: #{tpu_custom_call.1} parent=1 // pred_check
      _
    $region63: #{tpu_custom_call.1} parent=1 // pred_check_branch
      %135 = sbr.rel (0) target = $region65
    $region64: #{tpu_custom_call.1} parent=1 // pred_region
      %136 = dma.done [#allocation7], 256
    $region65: #{tpu_custom_call.1} parent=1 // pred_fallthru
      _
    // Predicated region
    $region66: #{tpu_custom_call.1} parent=1 // pred_check
      _
    $region67: #{tpu_custom_call.1} parent=1 // pred_check_branch
      %138 = sbr.rel (0) target = $region69
    $region68: #{tpu_custom_call.1} parent=1 // pred_region
      %139 = dma.done [#allocation10], 256
    $region69: #{tpu_custom_call.1} parent=1 // pred_fallthru
      _
    // Predicated region
    $region70: #{tpu_custom_call.1} parent=1 // pred_check
      _
    $region71: #{tpu_custom_call.1} parent=1 // pred_check_branch
      %141 = sbr.rel (0) target = $region73
    $region72: #{tpu_custom_call.1} parent=1 // pred_region
      %142 = dma.done [#allocation10], 512
    $region73: #{tpu_custom_call.1} parent=1 // pred_fallthru
      _
    // Predicated region
    $region74: #{tpu_custom_call.1} parent=1 // pred_check
      _
    $region75: #{tpu_custom_call.1} parent=1 // pred_check_branch
      %144 = sbr.rel (0) target = $region77
    $region76: #{tpu_custom_call.1} parent=1 // pred_region
      %145 = dma.done [#allocation13], 256
    $region77: #{tpu_custom_call.1} parent=1 // pred_fallthru
      _
    // Predicated region
    $region78: #{tpu_custom_call.1} parent=1 // pred_check
      _
    $region79: #{tpu_custom_call.1} parent=1 // pred_check_branch
      %147 = sbr.rel (0) target = $region81
    $region80: #{tpu_custom_call.1} parent=1 // pred_region
      %148 = dma.done [#allocation13], 256
    $region81: #{tpu_custom_call.1} parent=1 // pred_fallthru
      _
    // Predicated region
    $region82: #{tpu_custom_call.1} parent=1 // pred_check
      _
    $region83: #{tpu_custom_call.1} parent=1 // pred_check_branch
      %150 = sbr.rel (0) target = $region85
    $region84: #{tpu_custom_call.1} parent=1 // pred_region
      %151 = dma.done [#allocation16], 16
    $region85: #{tpu_custom_call.1} parent=1 // pred_fallthru
      _
    %p153 = scmp.eq.s32.totalorder 0, 0
    // Predicated region
    $region86: #{tpu_custom_call.1} parent=1 // pred_check
      %p154 = pneg %p153
    $region87: #{tpu_custom_call.1} parent=1 // pred_check_branch
      %156 = sbr.rel (%p154) target = $region89
    $region88: #{tpu_custom_call.1} parent=1 // pred_region
      %v157 = vld [vmem:[#allocation3] sm:$0x3]
      %v158 = vld [vmem:[#allocation6] sm:$0x3]
      %v159 = vld [vmem:[#allocation8] sm:$0xff]
      %v160 = vld [vmem:[#allocation8 + $0x8] sm:$0xff]
      %v161 = vld [vmem:[#allocation9] sm:$0xff]
      %v162 = vld [vmem:[#allocation9 + $0x8] sm:$0xff]
      %v163 = vld [vmem:[%s4] sm:$0x3]
      %v164 = vpack.c.bf16 %v158, %v158
      %v165 = vld [vmem:[#allocation11] sm:$0xff]
      %v166 = vld [vmem:[#allocation11 + $0x8] sm:$0xff]
      %v167 = vld [vmem:[#allocation11 + $0x10] sm:$0xff]
      %v168 = vld [vmem:[#allocation11 + $0x18] sm:$0xff]
      %v173 = vunpack.c.l.b16 %v165
      %v174 = vunpack.c.h.b16 %v165
      %v175 = vunpack.c.l.b16 %v166
      %v176 = vunpack.c.h.b16 %v166
      %v177 = vunpack.c.l.b16 %v167
      %v178 = vunpack.c.h.b16 %v167
      %v179 = vunpack.c.l.b16 %v168
      %v180 = vunpack.c.h.b16 %v168
      %v181 = vpack.c.b16 %v175, %v173
      %v182 = vpack.c.b16 %v176, %v174
      %v183 = vpack.c.b16 %v179, %v177
      %v184 = vpack.c.b16 %v180, %v178
      %vm189 = vcmask 261120
      %v191 = vsel %vm189, %v164, 0
      %193 = vmatprep.subr.bf16.mxu0 0
      %194 = vmatpush1.bf16.msra.mxu0 0
      %195 = vmatprep.subr.bf16.mxu0 0
      %196 = vmatpush1.bf16.msra.mxu0 0
      %197 = vmatprep.subr.bf16.mxu0 0
      %198 = vmatpush1.bf16.msra.mxu0 0
      %199 = vmatprep.subr.bf16.mxu0 0
      %200 = vmatpush1.bf16.msra.mxu0 0
      %201 = vmatprep.subr.bf16.mxu0 0
      %202 = vmatpush1.bf16.msra.mxu0 0
      %203 = vmatprep.subr.bf16.mxu0 0
      %204 = vmatpush1.bf16.msra.mxu0 0
      %205 = vmatprep.subr.bf16.mxu0 %v184
      %206 = vmatpush1.bf16.msra.mxu0 %v183
      %207 = vmatprep.subr.bf16.mxu0 %v182
      %208 = vmatpush1.bf16.msra.mxu0 %v181
      %209 = vmatprep.subr.bf16.mxu0 0
      %210 = vmatpush2.bf16.msra.mxu0 0
      %211 = vmatprep.subr.bf16.mxu0 0
      %212 = vmatpush2.bf16.msra.mxu0 0
      %213 = vmatprep.subr.bf16.mxu0 0
      %214 = vmatpush2.bf16.msra.mxu0 0
      %215 = vmatprep.subr.bf16.mxu0 0
      %216 = vmatpush2.bf16.msra.mxu0 0
      %217 = vmatprep.subr.bf16.mxu0 0
      %218 = vmatpush2.bf16.msra.mxu0 0
      %219 = vmatprep.subr.bf16.mxu0 0
      %220 = vmatpush2.bf16.msra.mxu0 0
      %221 = vmatprep.subr.bf16.mxu0 0
      %222 = vmatpush2.bf16.msra.mxu0 0
      %223 = vmatprep.subr.bf16.mxu0 0
      %224 = vmatpush2.bf16.msra.mxu0 0
      %225 = vmatprep.mubr.bf16.mxu0 0
      %226 = vmatmul.mubr.bf16.gmra.mxu0 %v191
      %v227 = vpop.f32.mrf.mxu0
      %v228 = vadd.f32 0.0, %v227
      %v229 = vpop.f32.mrf.mxu0
      %v230 = vadd.f32 0.0, %v229
      %v231 = vpop.f32.mrf.mxu0
      %v232 = vpop.f32.mrf.mxu0
      %233 = vdwg.mxu0
      %v234 = vld [vmem:[#allocation15] sm:$0x1]
      %v236 = vlaneseq
      %v237 = vshrl.u32 %v236, 7
      %v238 = vsub.s32 0, %v237
      %v239 = vrot.slane %v234, %v238
      %v241 = vadd.f32 %v228, %v239
      %v244 = vunpack.c.l.s4 1966171168
      %v245 = vunpack.c.0.s8 %v244
      %v246 = vlaneseq
      %v247 = vshrl.u32 %v246, 7
      %v248 = vsub.s32 %v245, %v247
      %v249 = vrot.slane %v230, %v248
      %v250 = vcombine.high %v249, %v249
      %v252 = vunpack.c.l.s4 1966171168
      %v253 = vunpack.c.0.s8 %v252
      %v254 = vlaneseq
      %v255 = vshrl.u32 %v254, 7
      %v256 = vsub.s32 %v253, %v255
      %v257 = vrot.slane %v249, %v256
      %v259 = vunpack.c.l.s4 1966171168
      %v260 = vunpack.c.0.s8 %v259
      %v261 = vlaneseq
      %v262 = vshrl.u32 %v261, 7
      %v263 = vsub.s32 %v260, %v262
      %v264 = vrot.slane %v250, %v263
      %v265 = vlaneseq
      %v266 = vshrl.u32 %v265, 7
      %v267 = vsub.s32 0, %v266
      %v268 = vrot.slane %v257, %v267
      %v269 = vlaneseq
      %v270 = vshrl.u32 %v269, 7
      %v271 = vsub.s32 0, %v270
      %v272 = vrot.slane %v264, %v271
      %v275 = vadd.f32 %v161, %v268
      %v276 = vadd.f32 %v162, %v272
      %v277 = vtanh.pop %v275
      %v278 = vtanh.pop %v276
      %v279 = vld [vmem:[%s5] sm:$0x1]
      %v281 = vlaneseq
      %v282 = vshrl.u32 %v281, 7
      %v283 = vsub.s32 0, %v282
      %v284 = vrot.slane %v279, %v283
      %v286 = vmul.f32 %v277, %v284
      %v287 = vmul.f32 %v278, %v284
      %v288 = vsel %vm189, %v286, 0.0
      %289 = vadd.xlane.f32.xlu0 %v288
      %v290 = vpop.xlane.xlu0 %289
      %v291 = vsel %vm189, %v287, 0.0
      %292 = vadd.xlane.f32.xlu0 %v291
      %v293 = vpop.xlane.xlu0 %292
      %vm294 = vcmp.gt.f32.partialorder %v163, 0.5
      %v297 = vlaneseq
      %v298 = vand.u32 %v297, 127
      %v299 = vlaneseq
      %v300 = vshrl.u32 %v299, 7
      %v301 = vsub.s32 %v298, %v300
      %v302 = vrot.slane %v290, %v301
      %v303 = vlaneseq
      %v304 = vshrl.u32 %v303, 7
      %v305 = vsub.s32 %v298, %v304
      %v306 = vrot.slane %v293, %v305
      %vm307 = vcmask 1041409
      %v308 = vsel %vm307, %v306, %v302
      %v310 = vsel %vm294, %v308, -1e+10
      %vm311 = vcmask 58368
      %v312 = vsel %vm311, %v310, -inf
      %313 = vmax.xlane.f32.xlu0 %v312
      %v314 = vpop.xlane.xlu0 %313
      %v315 = vsub.f32 %v310, %v314
      %v316 = vmul.f32 %v315, 1.442695
      %v317 = vpow.pop %v316
      %v318 = vsel %vm311, %v317, 0.0
      %319 = vadd.xlane.f32.xlu0 %v318
      %v320 = vpop.xlane.xlu0 %319
      %v321 = vrcp.pop %v320
      %v322 = vmul.f32 %v317, %v321
      %323 = vst.msk [vmem:[#allocation18] sm:$0x3] %vm311, %v322
      %v324 = vrcp.pop %v320
      %v325 = vmul.f32 %v317, %v324
      %v326 = vlaneseq
      %v327 = vshrl.u32 %v326, 7
      %v328 = vsub.s32 0, %v327
      %v329 = vrot.slane %v325, %v328
      %331 = vbcast.lane.b32.xlu0 %v329, 256
      %v332 = vpop.permute.xlu0 %331
      %v333 = vlaneseq
      %v334 = vshrl.u32 %v333, 7
      %v335 = vsub.s32 1, %v334
      %v336 = vrot.slane %v325, %v335
      %338 = vbcast.lane.b32.xlu0 %v336, 256
      %v339 = vpop.permute.xlu0 %338
      %v340 = vmul.f32 %v332, %v159
      %v341 = vmul.f32 %v339, %v160
      %v342 = vsel %vm189, %v340, 0.0
      %v343 = vrot.slane %v342, 4
      %v344 = vadd.f32 %v342, %v343
      %v345 = vrot.slane %v344, 2
      %v346 = vadd.f32 %v344, %v345
      %v347 = vrot.slane %v346, 1
      %v348 = vadd.f32 %v346, %v347
      %v349 = vsel %vm189, %v341, 0.0
      %v350 = vrot.slane %v349, 4
      %v351 = vadd.f32 %v349, %v350
      %v352 = vrot.slane %v351, 2
      %v353 = vadd.f32 %v351, %v352
      %v354 = vrot.slane %v353, 1
      %v355 = vadd.f32 %v353, %v354
      %v356 = vpack.c.bf16 %v157, %v157
      %v357 = vld [vmem:[#allocation12] sm:$0xf]
      %v358 = vld [vmem:[#allocation12 + $0x4] sm:$0xf]
      %v359 = vld [vmem:[#allocation12 + $0x8] sm:$0xf]
      %v360 = vld [vmem:[#allocation12 + $0xc] sm:$0xf]
      %v361 = vpack.c.bf16 %v348, %v348
      %v362 = vpack.c.bf16 %v355, %v355
      %v363 = vld [vmem:[#allocation14] sm:$0xf]
      %v364 = vld [vmem:[#allocation14 + $0x4] sm:$0xf]
      %v365 = vld [vmem:[#allocation14 + $0x8] sm:$0xf]
      %v366 = vld [vmem:[#allocation14 + $0xc] sm:$0xf]
      %v369 = vunpack.c.l.b16 %v361
      %v370 = vunpack.c.l.b16 %v362
      %v371 = vsel %vm307, %v370, %v369
      %v372 = vpack.c.b16 %v371, %v371
      %v377 = vunpack.c.l.b16 %v363
      %v378 = vunpack.c.l.b16 %v364
      %v379 = vunpack.c.l.b16 %v365
      %v380 = vunpack.c.l.b16 %v366
      %v381 = vpack.c.b16 %v378, %v377
      %v382 = vpack.c.b16 %v380, %v379
      %v386 = vsel %vm189, %v372, 0
      %388 = vmatprep.subr.bf16.mxu0 0
      %389 = vmatpush1.bf16.msra.mxu0 0
      %390 = vmatprep.subr.bf16.mxu0 0
      %391 = vmatpush1.bf16.msra.mxu0 0
      %392 = vmatprep.subr.bf16.mxu0 0
      %393 = vmatpush1.bf16.msra.mxu0 0
      %394 = vmatprep.subr.bf16.mxu0 0
      %395 = vmatpush1.bf16.msra.mxu0 0
      %396 = vmatprep.subr.bf16.mxu0 0
      %397 = vmatpush1.bf16.msra.mxu0 0
      %398 = vmatprep.subr.bf16.mxu0 0
      %399 = vmatpush1.bf16.msra.mxu0 0
      %400 = vmatprep.subr.bf16.mxu0 0
      %401 = vmatpush1.bf16.msra.mxu0 %v382
      %402 = vmatprep.subr.bf16.mxu0 0
      %403 = vmatpush1.bf16.msra.mxu0 %v381
      %404 = vmatprep.subr.bf16.mxu0 0
      %405 = vmatpush2.bf16.msra.mxu0 0
      %406 = vmatprep.subr.bf16.mxu0 0
      %407 = vmatpush2.bf16.msra.mxu0 0
      %408 = vmatprep.subr.bf16.mxu0 0
      %409 = vmatpush2.bf16.msra.mxu0 0
      %410 = vmatprep.subr.bf16.mxu0 0
      %411 = vmatpush2.bf16.msra.mxu0 0
      %412 = vmatprep.subr.bf16.mxu0 0
      %413 = vmatpush2.bf16.msra.mxu0 0
      %414 = vmatprep.subr.bf16.mxu0 0
      %415 = vmatpush2.bf16.msra.mxu0 0
      %416 = vmatprep.subr.bf16.mxu0 0
      %417 = vmatpush2.bf16.msra.mxu0 0
      %418 = vmatprep.subr.bf16.mxu0 0
      %419 = vmatpush2.bf16.msra.mxu0 0
      %420 = vmatprep.mubr.bf16.mxu0 0
      %421 = vmatmul.mubr.bf16.gmra.mxu0 %v386
      %v422 = vpop.f32.mrf.mxu0
      %v423 = vadd.f32 0.0, %v422
      %v424 = vpop.f32.mrf.mxu0
      %v425 = vpop.f32.mrf.mxu0
      %v426 = vpop.f32.mrf.mxu0
      %427 = vdwg.mxu0
      %v432 = vunpack.c.l.b16 %v357
      %v433 = vunpack.c.l.b16 %v358
      %v434 = vunpack.c.l.b16 %v359
      %v435 = vunpack.c.l.b16 %v360
      %v436 = vpack.c.b16 %v433, %v432
      %v437 = vpack.c.b16 %v435, %v434
      %v441 = vsel %vm189, %v356, 0
      %443 = vmatprep.subr.bf16.mxu0 0
      %444 = vmatpush1.bf16.msra.mxu0 0
      %445 = vmatprep.subr.bf16.mxu0 0
      %446 = vmatpush1.bf16.msra.mxu0 0
      %447 = vmatprep.subr.bf16.mxu0 0
      %448 = vmatpush1.bf16.msra.mxu0 0
      %449 = vmatprep.subr.bf16.mxu0 0
      %450 = vmatpush1.bf16.msra.mxu0 0
      %451 = vmatprep.subr.bf16.mxu0 0
      %452 = vmatpush1.bf16.msra.mxu0 0
      %453 = vmatprep.subr.bf16.mxu0 0
      %454 = vmatpush1.bf16.msra.mxu0 0
      %455 = vmatprep.subr.bf16.mxu0 0
      %456 = vmatpush1.bf16.msra.mxu0 %v437
      %457 = vmatprep.subr.bf16.mxu0 0
      %458 = vmatpush1.bf16.msra.mxu0 %v436
      %459 = vmatprep.subr.bf16.mxu0 0
      %460 = vmatpush2.bf16.msra.mxu0 0
      %461 = vmatprep.subr.bf16.mxu0 0
      %462 = vmatpush2.bf16.msra.mxu0 0
      %463 = vmatprep.subr.bf16.mxu0 0
      %464 = vmatpush2.bf16.msra.mxu0 0
      %465 = vmatprep.subr.bf16.mxu0 0
      %466 = vmatpush2.bf16.msra.mxu0 0
      %467 = vmatprep.subr.bf16.mxu0 0
      %468 = vmatpush2.bf16.msra.mxu0 0
      %469 = vmatprep.subr.bf16.mxu0 0
      %470 = vmatpush2.bf16.msra.mxu0 0
      %471 = vmatprep.subr.bf16.mxu0 0
      %472 = vmatpush2.bf16.msra.mxu0 0
      %473 = vmatprep.subr.bf16.mxu0 0
      %474 = vmatpush2.bf16.msra.mxu0 0
      %475 = vmatprep.mubr.bf16.mxu0 0
      %476 = vmatmul.mubr.bf16.gmra.mxu0 %v441
      %v477 = vpop.f32.mrf.mxu0
      %v478 = vadd.f32 %v423, %v477
      %v479 = vpop.f32.mrf.mxu0
      %v480 = vpop.f32.mrf.mxu0
      %v481 = vpop.f32.mrf.mxu0
      %482 = vdwg.mxu0
      %v483 = vld [vmem:[%s9] sm:$0x1]
      %v485 = vlaneseq
      %v486 = vshrl.u32 %v485, 7
      %v487 = vsub.s32 0, %v486
      %v488 = vrot.slane %v483, %v487
      %v490 = vadd.f32 %v478, %v488
      %v491 = vadd.f32 %v490, %v241
      %v492 = vxor.u32 %v491, 2147483648
      %v493 = vmul.f32 %v492, 1.442695
      %v494 = vpow.pop %v493
      %v495 = vadd.f32 %v494, 1.0
      %v496 = vrcp.pop %v495
      %v497 = vmul.f32 1.0, %v496
      %499 = vrot.lane.b32.xlu0 %v241, 64
      %v500 = vpop.permute.xlu0 %499
      %v502 = vmul.f32 %v497, %v500
      %504 = vrot.lane.b32.xlu0 %v502, 64
      %v505 = vpop.permute.xlu0 %504
      %v507 = vadd.f32 %v490, %v505
      %v508 = vtanh.pop %v507
      %v509 = vsub.f32 1.0, %v497
      %511 = vrot.lane.b32.xlu0 %v508, 96
      %v512 = vpop.permute.xlu0 %511
      %v514 = vmul.f32 %v509, %v512
      %516 = vrot.lane.b32.xlu0 %v158, 32
      %v517 = vpop.permute.xlu0 %516
      %v519 = vmul.f32 %v497, %v517
      %v520 = vadd.f32 %v514, %v519
      %522 = vrot.lane.b32.xlu0 %v520, 96
      %v523 = vpop.permute.xlu0 %522
      %vm525 = vcmask 254976
      %526 = vst.msk [vmem:[#allocation17] sm:$0x3] %vm525, %v523
      %v527 = vpack.c.bf16 %v520, %v520
      %v530 = vunpack.c.l.s4 1966171168
      %v531 = vunpack.c.0.s8 %v530
      %v532 = vlaneseq
      %v533 = vshrl.u32 %v532, 7
      %v534 = vsub.s32 %v531, %v533
      %v535 = vrot.slane %v527, %v534
      %v537 = vunpack.c.l.s4 1966171168
      %v538 = vunpack.c.0.s8 %v537
      %v539 = vlaneseq
      %v540 = vshrl.u32 %v539, 7
      %v541 = vsub.s32 %v538, %v540
      %v542 = vrot.slane %v535, %v541
      %543 = vrot.lane.b32.xlu0 %v542, 96
      %v544 = vpop.permute.xlu0 %543
      %vm546 = vcmask 253952
      %547 = vst.msk [vmem:[#allocation2] sm:$0x1] %vm546, %v544
    $region89: #{tpu_custom_call.1} parent=1 // pred_fallthru
      _
    %v548 = vld [vmem:[#allocation2] sm:$0x1]
    %v549 = vld [vmem:[%s11] sm:$0xf]
    %v550 = vld [vmem:[%s11 + $0x4] sm:$0xf]
    %v551 = vld [vmem:[%s11 + $0x8] sm:$0xf]
    %v552 = vld [vmem:[%s11 + $0xc] sm:$0xf]
    %v553 = vld [vmem:[%s12] sm:$0x1]
    %v555 = vlaneseq
    %v556 = vshrl.u32 %v555, 7
    %v557 = vsub.s32 0, %v556
    %v558 = vrot.slane %v553, %v557
    %v564 = vunpack.c.l.b16 %v549
    %v565 = vunpack.c.l.b16 %v550
    %v566 = vunpack.c.l.b16 %v551
    %v567 = vunpack.c.l.b16 %v552
    %v568 = vpack.c.b16 %v565, %v564
    %v569 = vpack.c.b16 %v567, %v566
    %vm572 = vcmask 261120
    %v574 = vsel %vm572, %v548, 0
    %576 = vmatprep.subr.bf16.mxu0 0
    %577 = vmatpush1.bf16.msra.mxu0 0
    %578 = vmatprep.subr.bf16.mxu0 0
    %579 = vmatpush1.bf16.msra.mxu0 0
    %580 = vmatprep.subr.bf16.mxu0 0
    %581 = vmatpush1.bf16.msra.mxu0 0
    %582 = vmatprep.subr.bf16.mxu0 0
    %583 = vmatpush1.bf16.msra.mxu0 0
    %584 = vmatprep.subr.bf16.mxu0 0
    %585 = vmatpush1.bf16.msra.mxu0 0
    %586 = vmatprep.subr.bf16.mxu0 0
    %587 = vmatpush1.bf16.msra.mxu0 0
    %588 = vmatprep.subr.bf16.mxu0 0
    %589 = vmatpush1.bf16.msra.mxu0 %v569
    %590 = vmatprep.subr.bf16.mxu0 0
    %591 = vmatpush1.bf16.msra.mxu0 %v568
    %592 = vmatprep.subr.bf16.mxu0 0
    %593 = vmatpush2.bf16.msra.mxu0 0
    %594 = vmatprep.subr.bf16.mxu0 0
    %595 = vmatpush2.bf16.msra.mxu0 0
    %596 = vmatprep.subr.bf16.mxu0 0
    %597 = vmatpush2.bf16.msra.mxu0 0
    %598 = vmatprep.subr.bf16.mxu0 0
    %599 = vmatpush2.bf16.msra.mxu0 0
    %600 = vmatprep.subr.bf16.mxu0 0
    %601 = vmatpush2.bf16.msra.mxu0 0
    %602 = vmatprep.subr.bf16.mxu0 0
    %603 = vmatpush2.bf16.msra.mxu0 0
    %604 = vmatprep.subr.bf16.mxu0 0
    %605 = vmatpush2.bf16.msra.mxu0 0
    %606 = vmatprep.subr.bf16.mxu0 0
    %607 = vmatpush2.bf16.msra.mxu0 0
    %608 = vmatprep.mubr.bf16.mxu0 0
    %609 = vmatmul.mubr.bf16.gmra.mxu0 %v574
    %v610 = vpop.f32.mrf.mxu0
    %v611 = vadd.f32 %v558, %v610
    %v612 = vpop.f32.mrf.mxu0
    %v613 = vpop.f32.mrf.mxu0
    %v614 = vpop.f32.mrf.mxu0
    %615 = vdwg.mxu0
    %616 = vst [vmem:[#allocation20] sm:$0x3] %v611
    // Predicated region
    $region90: #{tpu_custom_call.1} parent=1 // pred_check
      _
    $region91: #{tpu_custom_call.1} parent=1 // pred_check_branch
      %618 = sbr.rel (0) target = $region93
    $region92: #{tpu_custom_call.1} parent=1 // pred_region
      %s620 = ssub.s32 32, 32
      %621 = vsyncadd [#allocation5], %s620
      %s623 = sshll.u32 [#allocation17], 4
      %s624 = int_to_ptr.vmem [resolvable:$true] %s623
      %626 = dma.vmem_to_hbm [thread:$0]  %s624, 32, %s13, [#allocation5]
    $region93: #{tpu_custom_call.1} parent=1 // pred_fallthru
      _
    // Predicated region
    $region94: #{tpu_custom_call.1} parent=1 // pred_check
      _
    $region95: #{tpu_custom_call.1} parent=1 // pred_check_branch
      %628 = sbr.rel (0) target = $region97
    $region96: #{tpu_custom_call.1} parent=1 // pred_region
      %s630 = ssub.s32 32, 32
      %631 = vsyncadd [#allocation19], %s630
      %s633 = sshll.u32 [#allocation18], 4
      %s634 = int_to_ptr.vmem [resolvable:$true] %s633
      %636 = dma.vmem_to_hbm [thread:$0]  %s634, 32, %s14, [#allocation19]
    $region97: #{tpu_custom_call.1} parent=1 // pred_fallthru
      _
    // Predicated region
    $region98: #{tpu_custom_call.1} parent=1 // pred_check
      _
    $region99: #{tpu_custom_call.1} parent=1 // pred_check_branch
      %638 = sbr.rel (0) target = $region101
    $region100: #{tpu_custom_call.1} parent=1 // pred_region
      %s640 = ssub.s32 32, 32
      %641 = vsyncadd [#allocation19], %s640
      %s643 = sshll.u32 [#allocation20], 4
      %s644 = int_to_ptr.vmem [resolvable:$true] %s643
      %646 = dma.vmem_to_hbm [thread:$0]  %s644, 32, %s15, [#allocation19]
    $region101: #{tpu_custom_call.1} parent=1 // pred_fallthru
      _
    // Predicated region
    $region102: #{tpu_custom_call.1} parent=1 // pred_check
      _
    $region103: #{tpu_custom_call.1} parent=1 // pred_check_branch
      %648 = sbr.rel (0) target = $region105
    $region104: #{tpu_custom_call.1} parent=1 // pred_region
      %649 = dma.done [#allocation5], 32
    $region105: #{tpu_custom_call.1} parent=1 // pred_fallthru
      _
    // Predicated region
    $region106: #{tpu_custom_call.1} parent=1 // pred_check
      _
    $region107: #{tpu_custom_call.1} parent=1 // pred_check_branch
      %651 = sbr.rel (0) target = $region109
    $region108: #{tpu_custom_call.1} parent=1 // pred_region
      %652 = dma.done [#allocation19], 32
    $region109: #{tpu_custom_call.1} parent=1 // pred_fallthru
      _
    // Predicated region
    $region110: #{tpu_custom_call.1} parent=1 // pred_check
      _
    $region111: #{tpu_custom_call.1} parent=1 // pred_check_branch
      %654 = sbr.rel (0) target = $region113
    $region112: #{tpu_custom_call.1} parent=1 // pred_region
      %655 = dma.done [#allocation19], 32
    $region113: #{tpu_custom_call.1} parent=1 // pred_fallthru
      _
    %656 = vsyncpa [#allocation4], 1
    %657 = vsyncpa [#allocation7], 1
    %658 = vsyncpa [#allocation10], 1
    %659 = vsyncpa [#allocation13], 1
    %660 = vsyncpa [#allocation16], 1
    %661 = vsyncpa [#allocation5], 1
    %662 = vsyncpa [#allocation19], 1

</llo_original>
